<compile_context>
chip_gen: v7x
topology: tpu7x:2x2x1
jax: 0.10.0
libtpu: 0.0.40
codegen_flags: <defaults>
</compile_context>

<pallas_src>
import jax
import jax.numpy as jnp
from jax.experimental import pallas as pl
from jax.experimental.pallas import tpu as pltpu


def _csse_apply_kernel(gate_ref, x_ref, wc_ref, bc_ref, o_ref):
    # gate_ref: (Bt, C, 1)   per-channel cSE gate (input dtype)
    # x_ref:    (Bt, C, HWt) input tile
    # wc_ref:   (1, C, 1)    1x1-conv weight (input dtype)
    # bc_ref:   (1,)         1x1-conv bias scalar (f32, SMEM)
    x = x_ref[...]                                               # (Bt, C, HWt)

    # ---- spatial SE gate: per-pixel sigmoid(sum_c wc[c]*x[:,c,:] + bc) ----
    # Product stays in the input dtype (2x lane throughput for bf16 on v6e/v7x),
    # accumulation in f32.  Sublane (channel) reduce rides the VPU/XLU.
    prod = x * wc_ref[...]                                       # (Bt, C, HWt)
    sp_lin = (jnp.sum(prod, axis=1, keepdims=True, dtype=jnp.float32)
              + bc_ref[0])                                       # (Bt, 1, HWt) f32
    sp_gate = jax.nn.sigmoid(sp_lin).astype(x.dtype)             # (Bt, 1, HWt)

    # ---- apply gates in the input dtype and combine with max ----
    ch_gate = gate_ref[...]                                      # (Bt, C, 1)
    o_ref[...] = jnp.maximum(x * ch_gate, x * sp_gate).astype(o_ref.dtype)


def _round_up(v, m):
    return (v + m - 1) // m * m


def _choose_tiles(B, C, HW, itemsize, budget_bytes):
    """Pick (Bt, HWt): x tile ~= budget bytes, lane tile a multiple of 128 (or
    the full HW), Bt a divisor of B.  Accounts for sublane padding of small C
    and guarantees >= 2 grid blocks when possible (v7x megacore)."""
    # TODO(synk): fold batch into the sublane dim when C < 8 (segment-sum channel
    # reduce) to avoid the 2x sublane-padding waste for e.g. C=4.
    c_pad = _round_up(C, 8)                 # VMEM sublane padding
    row_bytes = c_pad * itemsize

    # Lane tile: as large as the budget allows (multiple of 128), capped at HW.
    max_hwt = max(128, (budget_bytes // max(1, row_bytes)) // 128 * 128)
    if max_hwt >= HW:
        HWt = HW                            # full dim: always legal, no ragged tile
    else:
        HWt = max_hwt                       # 128-multiple; last tile may be ragged

    # Batch tile: largest divisor of B that keeps the tile within budget.
    tile_cap = max(1, budget_bytes // (row_bytes * HWt))
    Bt = 1
    for d in range(1, B + 1):
        if B % d == 0 and d <= tile_cap:
            Bt = d

    # Megacore: ensure the parallel grid has >= 2 blocks so both v7x TCs engage.
    n_hw = pl.cdiv(HW, HWt)
    if (B // Bt) * n_hw < 2:
        if B >= 2:
            for d in range(B - 1, 0, -1):   # largest proper divisor -> >=2 B-blocks
                if B % d == 0:
                    Bt = d
                    break
        elif HW >= 256:
            HWt = _round_up(pl.cdiv(HW, 2), 128)   # split HW into 2 tiles
    return Bt, HWt


def channel_spatial_se(x, params, *, tile_budget_bytes=6 << 20):
    """x: (B, C, H, W) NCHW.  Returns (B, C, H, W)."""
    B, C, H, W = x.shape
    HW = H * W
    dtype = x.dtype
    itemsize = jnp.dtype(dtype).itemsize

    # ---- cSE gate: tiny (B, C) MLP, batched over B once in XLA ----
    # dtype=f32 fuses the cast into the reduction (single pass over x in HBM).
    sq = jnp.mean(x, axis=(2, 3), dtype=jnp.float32)                     # (B, C)
    h = jax.nn.relu(sq @ params["w1"].astype(jnp.float32).T
                    + params["b1"].astype(jnp.float32))                  # (B, Cr)
    ch_gate = jax.nn.sigmoid(h @ params["w2"].astype(jnp.float32).T
                             + params["b2"].astype(jnp.float32))         # (B, C)
    ch_gate = ch_gate.astype(dtype).reshape(B, C, 1)

    # ---- streaming sSE + gate-apply kernel (no pad, ragged last tile) ----
    Bt, HWt = _choose_tiles(B, C, HW, itemsize, tile_budget_bytes)
    n_hw = pl.cdiv(HW, HWt)
    x2 = x.reshape(B, C, HW)

    wc = params["wc"].reshape(1, C, 1).astype(dtype)
    bc = params["bc"].reshape(1).astype(jnp.float32)

    # VMEM limit from the actual tile footprint: 2x double-buffered in + out,
    # plus room for the f32 reduce temporaries and small gate/weight blocks.
    c_pad = _round_up(C, 8)
    tile_bytes = Bt * c_pad * HWt * itemsize
    vmem_limit = int(max(16 << 20, 4 * tile_bytes + Bt * c_pad * HWt * 4 + (4 << 20)))

    cost = pl.CostEstimate(
        flops=int(6 * B * C * HW),
        transcendentals=int(B * HW),
        bytes_accessed=int(2 * B * C * HW * itemsize),
    )

    grid = (B // Bt, n_hw)
    out = pl.pallas_call(
        _csse_apply_kernel,
        out_shape=jax.ShapeDtypeStruct((B, C, HW), dtype),
        grid_spec=pltpu.PrefetchScalarGridSpec(
            num_scalar_prefetch=0,
            grid=grid,
            in_specs=[
                pl.BlockSpec((Bt, C, 1), lambda b, s: (b, 0, 0)),      # cSE gate
                pl.BlockSpec((Bt, C, HWt), lambda b, s: (b, 0, s)),    # x tile
                pl.BlockSpec((1, C, 1), lambda b, s: (0, 0, 0)),       # conv weight
                pl.BlockSpec(memory_space=pltpu.MemorySpace.SMEM),     # conv bias
            ],
            out_specs=pl.BlockSpec((Bt, C, HWt), lambda b, s: (b, 0, s)),
        ),
        compiler_params=pltpu.CompilerParams(
            dimension_semantics=("parallel", "parallel"),
            vmem_limit_bytes=vmem_limit,
        ),
        cost_estimate=cost,
    )(ch_gate, x2, wc, bc)

    return out.reshape(B, C, H, W)


def make_params(key, num_channels, reduction_ratio=2, dtype=jnp.float32):
    """Deterministic synthetic parameters matching the PyTorch module shapes."""
    Cr = num_channels // reduction_ratio
    ks = jax.random.split(key, 6)
    return {
        # nn.Linear(C, Cr): weight (Cr, C), bias (Cr,)
        "w1": (jax.random.normal(ks[0], (Cr, num_channels)) * 0.1).astype(dtype),
        "b1": (jax.random.normal(ks[1], (Cr,)) * 0.1).astype(dtype),
        # nn.Linear(Cr, C): weight (C, Cr), bias (C,)
        "w2": (jax.random.normal(ks[2], (num_channels, Cr)) * 0.1).astype(dtype),
        "b2": (jax.random.normal(ks[3], (num_channels,)) * 0.1).astype(dtype),
        # nn.Conv2d(C, 1, 1): weight (1, C, 1, 1) -> (1, C), bias (1,)
        "wc": (jax.random.normal(ks[4], (1, num_channels)) * 0.1).astype(dtype),
        "bc": (jax.random.normal(ks[5], (1,)) * 0.1).astype(dtype),
    }


def _reference(x, p):
    """Pure-JAX reference mirroring the PyTorch forward, for validation."""
    B, C, H, W = x.shape
    sq = x.reshape(B, C, H * W).mean(axis=2)                          # (B, C)
    h = jax.nn.relu(sq @ p["w1"].T + p["b1"])                         # (B, Cr)
    g = jax.nn.sigmoid(h @ p["w2"].T + p["b2"])                       # (B, C)
    cse = x * g[:, :, None, None]
    sp = jax.nn.sigmoid(jnp.einsum("bchw,c->bhw", x, p["wc"][0]) + p["bc"][0])
    sse = x * sp[:, None, :, :]
    return jnp.maximum(cse, sse)


if __name__ == "__main__":
    key = jax.random.PRNGKey(0)
    kx, kp, kx2, kp2 = jax.random.split(key, 4)

    # --- main test: small module-consistent shape ---
    B, C, H, W = 2, 4, 16, 16
    x = jax.random.normal(kx, (B, C, H, W), dtype=jnp.float32)
    params = make_params(kp, num_channels=C, reduction_ratio=2)

    out = jax.block_until_ready(channel_spatial_se(x, params))
    ref = _reference(x, params)
    assert out.shape == (B, C, H, W)
    assert jnp.allclose(out, ref, atol=1e-5, rtol=1e-5), "mismatch vs reference"

    # --- secondary test: exercise ragged-last-tile + multi-tile grid path ---
    B2, C2, H2, W2 = 2, 8, 40, 40                                     # HW=1600 (not 128-mult)
    x2 = jax.random.normal(kx2, (B2, C2, H2, W2), dtype=jnp.float32)
    params2 = make_params(kp2, num_channels=C2, reduction_ratio=2)
    out2 = jax.block_until_ready(
        channel_spatial_se(x2, params2, tile_budget_bytes=8 * 1024))  # force HW tiling
    ref2 = _reference(x2, params2)
    assert jnp.allclose(out2, ref2, atol=1e-5, rtol=1e-5), "mismatch vs reference (tiled)"

    print("KERNEL_OK")
</pallas_src>

<mosaic_0001>
module attributes {stable_mosaic.version = 11 : i64} {
  func.func @_csse_apply_kernel(%arg0: i32, %arg1: i32, %arg2: memref<1x4x1xf32, #tpu.memory_space<vmem>>, %arg3: memref<1x4x256xf32, #tpu.memory_space<vmem>>, %arg4: memref<1x4x1xf32, #tpu.memory_space<vmem>>, %arg5: memref<1xf32, #tpu.memory_space<smem>>, %arg6: memref<1x4x256xf32, #tpu.memory_space<vmem>>) attributes {dimension_semantics = [#tpu.dimension_semantics<parallel>, #tpu.dimension_semantics<parallel>], iteration_bounds = array<i64: 2, 1>, scalar_prefetch = 0 : i64, scratch_operands = 0 : i64, tpu.core_type = #tpu.core_type<tc>, window_params = [{transform_indices = @transform_0, window_bounds = array<i64: 1, 4, 1>}, {transform_indices = @transform_1, window_bounds = array<i64: 1, 4, 256>}, {pipeline_mode = #tpu.pipeline_mode<synchronous>, transform_indices = @transform_2, window_bounds = array<i64: 1, 4, 1>}, {transform_indices = @transform_3, window_bounds = array<i64: 1>}, {transform_indices = @transform_4, window_bounds = array<i64: 1, 4, 256>}]} {
    %c0 = arith.constant 0 : index
    %c0_0 = arith.constant 0 : index
    %c0_1 = arith.constant 0 : index
    %0 = vector.load %arg3[%c0, %c0_0, %c0_1] : memref<1x4x256xf32, #tpu.memory_space<vmem>>, vector<1x4x256xf32>
    %c0_2 = arith.constant 0 : index
    %c0_3 = arith.constant 0 : index
    %c0_4 = arith.constant 0 : index
    %1 = vector.load %arg4[%c0_2, %c0_3, %c0_4] : memref<1x4x1xf32, #tpu.memory_space<vmem>>, vector<1x4x1xf32>
    %2 = vector.broadcast %1 : vector<1x4x1xf32> to vector<1x4x256xf32>
    %3 = arith.mulf %0, %2 : vector<1x4x256xf32>
    %cst = arith.constant dense<0.000000e+00> : vector<1x256xf32>
    %4 = vector.multi_reduction <add>, %3, %cst [1] : vector<1x4x256xf32> to vector<1x256xf32>
    %5 = vector.shape_cast %4 : vector<1x256xf32> to vector<1x1x256xf32>
    %c0_5 = arith.constant 0 : index
    %6 = memref.load %arg5[%c0_5] : memref<1xf32, #tpu.memory_space<smem>>
    %7 = vector.broadcast %6 : f32 to vector<1x1x256xf32>
    %8 = arith.addf %5, %7 : vector<1x1x256xf32>
    %9 = arith.negf %8 : vector<1x1x256xf32>
    %10 = math.exp %9 : vector<1x1x256xf32>
    %cst_6 = arith.constant 1.000000e+00 : f32
    %11 = vector.broadcast %cst_6 : f32 to vector<1x1x256xf32>
    %12 = arith.addf %11, %10 : vector<1x1x256xf32>
    %13 = arith.divf %11, %12 : vector<1x1x256xf32>
    %c0_7 = arith.constant 0 : index
    %c0_8 = arith.constant 0 : index
    %c0_9 = arith.constant 0 : index
    %14 = vector.load %arg2[%c0_7, %c0_8, %c0_9] : memref<1x4x1xf32, #tpu.memory_space<vmem>>, vector<1x4x1xf32>
    %15 = vector.broadcast %14 : vector<1x4x1xf32> to vector<1x4x256xf32>
    %16 = arith.mulf %0, %15 : vector<1x4x256xf32>
    %17 = vector.broadcast %13 : vector<1x1x256xf32> to vector<1x4x256xf32>
    %18 = arith.mulf %0, %17 : vector<1x4x256xf32>
    %19 = arith.maximumf %16, %18 : vector<1x4x256xf32>
    %c0_10 = arith.constant 0 : index
    %c0_11 = arith.constant 0 : index
    %c0_12 = arith.constant 0 : index
    %20 = vector.load %arg6[%c0_10, %c0_11, %c0_12] : memref<1x4x256xf32, #tpu.memory_space<vmem>>, vector<1x4x256xf32>
    tpu.vector_store %arg6[%c0_10, %c0_11, %c0_12], %19 {strides = array<i32>} : memref<1x4x256xf32, #tpu.memory_space<vmem>>, vector<1x4x256xf32>,
    return
  }
  func.func @transform_0(%arg0: i32, %arg1: i32) -> (i32, i32, i32) {
    %c0_i32 = arith.constant 0 : i32
    %c0_i32_0 = arith.constant 0 : i32
    %c0_i32_1 = arith.constant 0 : i32
    return %arg0, %c0_i32, %c0_i32_0 : i32, i32, i32
  }
  func.func @transform_1(%arg0: i32, %arg1: i32) -> (i32, i32, i32) {
    %c0_i32 = arith.constant 0 : i32
    %c0_i32_0 = arith.constant 0 : i32
    return %arg0, %c0_i32, %arg1 : i32, i32, i32
  }
  func.func @transform_2(%arg0: i32, %arg1: i32) -> (i32, i32, i32) {
    %c0_i32 = arith.constant 0 : i32
    %c0_i32_0 = arith.constant 0 : i32
    %c0_i32_1 = arith.constant 0 : i32
    %c0_i32_2 = arith.constant 0 : i32
    return %c0_i32, %c0_i32_0, %c0_i32_1 : i32, i32, i32
  }
  func.func @transform_3(%arg0: i32, %arg1: i32) -> i32 {
    %c0_i32 = arith.constant 0 : i32
    %c0_i32_0 = arith.constant 0 : i32
    return %c0_i32 : i32
  }
  func.func @transform_4(%arg0: i32, %arg1: i32) -> (i32, i32, i32) {
    %c0_i32 = arith.constant 0 : i32
    %c0_i32_0 = arith.constant 0 : i32
    return %arg0, %c0_i32, %arg1 : i32, i32, i32
  }
}

</mosaic_0001>

<llo_original>
// kernel: tpu_custom_call.1
$region0: #{tpu_custom_call.1}
  #allocation0 [shape = 'u32[]', space=smem, size = 0x4, offset = 0x4, fixed_abs, tag = 'smem constant byte address 0x4 - core index']
  #allocation1 [shape = 'u32[144,128]{1,0:T(1,128)}', space=vmem, size = 0x12000, scoped, tag = 'internal scratch']
  #allocation2 [shape = 'f32[1]{0:T(128)S(6)}', space=smem, size = 0x200, scoped, tag = 'scoped memory for tpu_custom_call.1']
  %s0 = inlined_call_operand.vmem [shape: f32[2,4,1], index: 0, kind: input, shape index: {}]
  %s1 = inlined_call_operand.vmem [shape: f32[2,4,256], index: 1, kind: input, shape index: {}]
  %s2 = inlined_call_operand.vmem [shape: f32[1,4,1], index: 2, kind: input, shape index: {}]
  %s3 = inlined_call_operand.<no memory space> [shape: f32[1], index: 3, kind: input, shape index: {}]
  %s4 = inlined_call_operand.hbm [shape: f32[2,4,256], index: 4, kind: output, shape index: {}]
  %s5 = sld [smem:[#allocation0]]
  $region49: #{tpu_custom_call.1} parent=0
    _
  %s7 = ssub.s32 1, %s5
  %s8 = scalar_select 0, %s7, %s5
  %9 = sst [smem:[#allocation2]] %s3
  $region1: #{tpu_custom_call.1} parent=0
    #allocation3 [shape = 'u8[8192]{0}', space=vmem, size = 0x2000, scoped, tag = 'output window, operand 0']
    #allocation4 [shape = 's32[2]{0}', space=sflag, size = 0x8, scoped, tag = 'scoped memory for tpu_custom_call.1']
    %10 = vsyncpa [#allocation4], 0
    %s11 = scalar_lea.sflag [#allocation4], 1
    %12 = vsyncpa %s11, 0
    loop: start=0, step=1, limit=4
    $region2: #{tpu_custom_call.1} parent=1 // loop_pre_header
      _
    $region3: #{tpu_custom_call.1} parent=1 // loop_header
      %s14 = sphi 0, %s18
      %p15 = scmp.ge.s32.totalorder %s14, 4
      %s21 = sphi 0, %s33
      %s22 = sphi 0, %s29
      %s23 = sphi 0, %s21
      %s24 = sphi 0, %s22
      %s25 = sphi 0, %s23
      %s26 = sphi 0, %s24
      %s36 = sphi 0, %s38
      %s39 = sphi 0, %s36
      %s40 = sphi 0, %s39
      %s56 = sphi 0, %s40
      %s64 = sphi 0, %s66
      %s67 = sphi 0, %s64
      %s68 = sphi 0, %s67
      %s84 = sphi 0, %s68
      %s88 = sphi 0, %s88
      %s90 = sphi 0, %s88
      %s91 = sphi 0, %s90
      %s105 = sphi 0, %s91
      %s109 = sphi 0, %s109
      %s111 = sphi 0, %s109
      %s112 = sphi 0, %s111
      %s126 = sphi 0, %s112
      %s134 = sphi 0, %s136
      %s137 = sphi 0, %s134
      %s138 = sphi 0, %s137
      %s154 = sphi 0, %s138
    $region4: #{tpu_custom_call.1} parent=1 // loop_header_branch
      %17 = sbr.rel (%p15) target = $region8
    $region5: #{tpu_custom_call.1} parent=1 // loop_body
      %s19 = ssub.s32 %s14, 1
      %s20 = ssub.s32 %s14, 2
      %s27 = sadd.s32 1, %s22
      %p28 = scmp.ge.s32.totalorder %s27, 1
      %s29 = scalar_select %p28, 0, %s27
      %s30 = sadd.s32 1, %s21
      %s31 = scalar_select %p28, %s30, %s21
      %p32 = scmp.ge.s32.totalorder %s31, 2
      %s33 = scalar_select %p32, 0, %s31
      %s34 = ssub.s32 %s21, %s33
      %p35 = scmp.eq.s32.totalorder %s34, 0
      %s37 = sadd.s32 %s36, 1
      %s38 = scalar_select %p35, %s36, %s37
      %p41 = pneg %p35
      %p42 = scmp.eq.s32.totalorder %s14, 1
      %p43 = por %p41, %p42
      %p44 = scmp.ne.s32.totalorder %s36, %s39
      %p45 = scmp.eq.s32.totalorder %s14, 0
      %p46 = por %p44, %p45
      %p47 = scmp.ne.s32.totalorder %s36, %s39
      %p48 = scmp.eq.s32.totalorder %s19, 1
      %p49 = por %p47, %p48
      %p50 = scmp.ne.s32.totalorder %s39, %s40
      %p51 = scmp.eq.s32.totalorder %s19, 0
      %p52 = por %p50, %p51
      %p53 = scmp.ne.s32.totalorder %s39, %s40
      %p54 = scmp.eq.s32.totalorder %s20, 1
      %p55 = por %p53, %p54
      %p57 = scmp.ne.s32.totalorder %s40, %s56
      %p58 = scmp.eq.s32.totalorder %s20, 0
      %p59 = por %p57, %p58
      %s60 = ssub.s32 %s21, %s33
      %s61 = ssub.s32 %s22, %s29
      %s62 = sor.u32 %s60, %s61
      %p63 = scmp.eq.s32.totalorder %s62, 0
      %s65 = sadd.s32 %s64, 1
      %s66 = scalar_select %p63, %s64, %s65
      %p69 = pneg %p63
      %p70 = scmp.eq.s32.totalorder %s14, 1
      %p71 = por %p69, %p70
      %p72 = scmp.ne.s32.totalorder %s64, %s67
      %p73 = scmp.eq.s32.totalorder %s14, 0
      %p74 = por %p72, %p73
      %p75 = scmp.ne.s32.totalorder %s64, %s67
      %p76 = scmp.eq.s32.totalorder %s19, 1
      %p77 = por %p75, %p76
      %p78 = scmp.ne.s32.totalorder %s67, %s68
      %p79 = scmp.eq.s32.totalorder %s19, 0
      %p80 = por %p78, %p79
      %p81 = scmp.ne.s32.totalorder %s67, %s68
      %p82 = scmp.eq.s32.totalorder %s20, 1
      %p83 = por %p81, %p82
      %p85 = scmp.ne.s32.totalorder %s68, %s84
      %p86 = scmp.eq.s32.totalorder %s20, 0
      %p87 = por %p85, %p86
      %s89 = sadd.s32 %s88, 1
      %p92 = scmp.eq.s32.totalorder %s14, 1
      %p93 = scmp.ne.s32.totalorder %s88, %s90
      %p94 = scmp.eq.s32.totalorder %s14, 0
      %p95 = por %p93, %p94
      %p96 = scmp.ne.s32.totalorder %s88, %s90
      %p97 = scmp.eq.s32.totalorder %s19, 1
      %p98 = por %p96, %p97
      %p99 = scmp.ne.s32.totalorder %s90, %s91
      %p100 = scmp.eq.s32.totalorder %s19, 0
      %p101 = por %p99, %p100
      %p102 = scmp.ne.s32.totalorder %s90, %s91
      %p103 = scmp.eq.s32.totalorder %s20, 1
      %p104 = por %p102, %p103
      %p106 = scmp.ne.s32.totalorder %s91, %s105
      %p107 = scmp.eq.s32.totalorder %s20, 0
      %p108 = por %p106, %p107
      %s110 = sadd.s32 %s109, 1
      %p113 = scmp.eq.s32.totalorder %s14, 1
      %p114 = scmp.ne.s32.totalorder %s109, %s111
      %p115 = scmp.eq.s32.totalorder %s14, 0
      %p116 = por %p114, %p115
      %p117 = scmp.ne.s32.totalorder %s109, %s111
      %p118 = scmp.eq.s32.totalorder %s19, 1
      %p119 = por %p117, %p118
      %p120 = scmp.ne.s32.totalorder %s111, %s112
      %p121 = scmp.eq.s32.totalorder %s19, 0
      %p122 = por %p120, %p121
      %p123 = scmp.ne.s32.totalorder %s111, %s112
      %p124 = scmp.eq.s32.totalorder %s20, 1
      %p125 = por %p123, %p124
      %p127 = scmp.ne.s32.totalorder %s112, %s126
      %p128 = scmp.eq.s32.totalorder %s20, 0
      %p129 = por %p127, %p128
      %s130 = ssub.s32 %s21, %s33
      %s131 = ssub.s32 %s22, %s29
      %s132 = sor.u32 %s130, %s131
      %p133 = scmp.eq.s32.totalorder %s132, 0
      %s135 = sadd.s32 %s134, 1
      %s136 = scalar_select %p133, %s134, %s135
      %p139 = pneg %p133
      %p140 = scmp.eq.s32.totalorder %s14, 1
      %p141 = por %p139, %p140
      %p142 = scmp.ne.s32.totalorder %s134, %s137
      %p143 = scmp.eq.s32.totalorder %s14, 0
      %p144 = por %p142, %p143
      %p145 = scmp.ne.s32.totalorder %s134, %s137
      %p146 = scmp.eq.s32.totalorder %s19, 1
      %p147 = por %p145, %p146
      %p148 = scmp.ne.s32.totalorder %s137, %s138
      %p149 = scmp.eq.s32.totalorder %s19, 0
      %p150 = por %p148, %p149
      %p151 = scmp.ne.s32.totalorder %s137, %s138
      %p152 = scmp.eq.s32.totalorder %s20, 1
      %p153 = por %p151, %p152
      %p155 = scmp.ne.s32.totalorder %s138, %s154
      %p156 = scmp.eq.s32.totalorder %s20, 0
      %p157 = por %p155, %p156
      %p158 = scmp.le.s32.totalorder 1, %s14
      %p159 = scmp.lt.s32.totalorder %s14, 3
      %p160 = pnand %p158, %p159
      %p161 = pneg %p160
      // Predicated region
      $region9: #{tpu_custom_call.1} parent=5 // pred_check
        _
      $region10: #{tpu_custom_call.1} parent=5 // pred_check_branch
        %163 = sbr.rel (%p160) target = $region12
      $region11: #{tpu_custom_call.1} parent=5 // pred_region
        %s164 = ssub.s32 %s14, 1
        // Predicated region
        $region13: #{tpu_custom_call.1} parent=11 // pred_check
          %p165 = pneg %p101
        $region14: #{tpu_custom_call.1} parent=11 // pred_check_branch
          %167 = sbr.rel (%p165) target = $region16
        $region15: #{tpu_custom_call.1} parent=11 // pred_region
          _
        $region16: #{tpu_custom_call.1} parent=11 // pred_fallthru
          _
        // Predicated region
        $region17: #{tpu_custom_call.1} parent=11 // pred_check
          %p168 = pneg %p122
        $region18: #{tpu_custom_call.1} parent=11 // pred_check_branch
          %170 = sbr.rel (%p168) target = $region20
        $region19: #{tpu_custom_call.1} parent=11 // pred_region
          _
        $region20: #{tpu_custom_call.1} parent=11 // pred_fallthru
          _
      $region12: #{tpu_custom_call.1} parent=5 // pred_fallthru
        _
      %p171 = scmp.lt.s32.totalorder %s14, 2
      // Predicated region
      $region21: #{tpu_custom_call.1} parent=5 // pred_check
        %p172 = pneg %p171
      $region22: #{tpu_custom_call.1} parent=5 // pred_check_branch
        %174 = sbr.rel (%p172) target = $region24
      $region23: #{tpu_custom_call.1} parent=5 // pred_region
        // Predicated region
        $region25: #{tpu_custom_call.1} parent=23 // pred_check
          %p175 = pneg %p46
        $region26: #{tpu_custom_call.1} parent=23 // pred_check_branch
          %177 = sbr.rel (%p175) target = $region28
        $region27: #{tpu_custom_call.1} parent=23 // pred_region
          %p178 = scmp.lt.s32.totalorder %s21, 1
          %s179 = scalar_select %p178, %s21, 1
          %s180 = smul.addr %s179, 4
          %s181 = scalar_lea.vmem %s0, %s180
        $region28: #{tpu_custom_call.1} parent=23 // pred_fallthru
          _
        // Predicated region
        $region29: #{tpu_custom_call.1} parent=23 // pred_check
          %p182 = pneg %p74
        $region30: #{tpu_custom_call.1} parent=23 // pred_check_branch
          %184 = sbr.rel (%p182) target = $region32
        $region31: #{tpu_custom_call.1} parent=23 // pred_region
          %s185 = smul.u32 2, %s22
          %p186 = scmp.lt.s32.totalorder %s21, 1
          %s187 = scalar_select %p186, %s21, 1
          %p188 = scmp.lt.s32.totalorder %s185, 1
          %s189 = scalar_select %p188, %s185, 1
          %s190 = smul.addr %s187, 2
          %s191 = sadd.s32 %s189, %s190
          %s192 = smul.addr %s191, 4
          %s193 = scalar_lea.vmem %s1, %s192
          %s194 = smul.u32 2, %s22
        $region32: #{tpu_custom_call.1} parent=23 // pred_fallthru
          _
      $region24: #{tpu_custom_call.1} parent=5 // pred_fallthru
        _
      %p195 = scmp.le.s32.totalorder 1, %s14
      %p196 = scmp.lt.s32.totalorder %s14, 3
      %p197 = pnand %p195, %p196
      %p198 = pneg %p197
      // Predicated region
      $region33: #{tpu_custom_call.1} parent=5 // pred_check
        _
      $region34: #{tpu_custom_call.1} parent=5 // pred_check_branch
        %200 = sbr.rel (%p197) target = $region36
      $region35: #{tpu_custom_call.1} parent=5 // pred_region
        %s201 = ssub.s32 %s14, 1
        %p202 = scmp.lt.s32.totalorder %s23, 1
        %s203 = scalar_select %p202, %s23, 1
        %s204 = smul.addr %s203, 4
        %s205 = scalar_lea.vmem %s0, %s204
        %p206 = pneg %p52
        %p207 = pneg %p49
        %s208 = smul.u32 2, %s24
        %p209 = scmp.lt.s32.totalorder %s23, 1
        %s210 = scalar_select %p209, %s23, 1
        %p211 = scmp.lt.s32.totalorder %s208, 1
        %s212 = scalar_select %p211, %s208, 1
        %s213 = smul.addr %s210, 2
        %s214 = sadd.s32 %s212, %s213
        %s215 = smul.addr %s214, 4
        %s216 = scalar_lea.vmem %s1, %s215
        %p217 = pneg %p80
        %p218 = pneg %p77
        %p219 = pneg %p101
        %p220 = pneg %p98
        %p221 = pneg %p122
        %p222 = pneg %p119
        %p223 = pneg %p150
        %p224 = pneg %p147
        %s225 = sand.u32 %s137, 1
        %s226 = scalar_lea.sflag [#allocation4], %s225
        %s227 = sand.u32 %s137, 1
        %s228 = smul.addr %s227, 8
        %s229 = scalar_lea.vmem [#allocation3], %s228
        %p230 = scmp.lt.s32.totalorder %s23, 1
        %s231 = scalar_select %p230, %s23, 1
        %s232 = smul.addr %s231, 4
        %s233 = scalar_lea.vmem %s0, %s232
        %s234 = smul.u32 2, %s24
        %p235 = scmp.lt.s32.totalorder %s23, 1
        %s236 = scalar_select %p235, %s23, 1
        %p237 = scmp.lt.s32.totalorder %s234, 1
        %s238 = scalar_select %p237, %s234, 1
        %s239 = smul.addr %s236, 2
        %s240 = sadd.s32 %s238, %s239
        %s241 = smul.addr %s240, 4
        %s242 = scalar_lea.vmem %s1, %s241
        %s243 = smul.u32 2, %s24
        %s244 = smul.u32 2, %s24
        %v245 = vld [vmem:[%s242] sm:$0xff]
        %v246 = vld [vmem:[%s2] sm:$0xf]
        %248 = vset.pattern.permute.xlu0 0
        %249 = vperm.xlu0 %248, %v246
        %v250 = vpop.permute.xlu0 %249
        %v252 = vunpack.c.l.s4 839922192
        %v253 = vunpack.c.0.s8 %v252
        %v254 = vlaneseq
        %v255 = vshrl.u32 %v254, 7
        %v256 = vsub.s32 %v253, %v255
        %v257 = vrot.slane %v250, %v256
        %v259 = vmul.f32 %v245, %v257
        %v261 = vcombine.high %v259, %v259
        %vm263 = vcmask 1043456
        %v264 = vsel %vm263, %v259, 0.0
        %v265 = vrot.slane %v264, 4
        %v266 = vadd.f32 %v264, %v265
        %v267 = vrot.slane %v266, 2
        %v268 = vadd.f32 %v266, %v267
        %v269 = vrot.slane %v268, 1
        %v270 = vadd.f32 %v268, %v269
        %v271 = vsel %vm263, %v261, 0.0
        %v272 = vrot.slane %v271, 4
        %v273 = vadd.f32 %v271, %v272
        %v274 = vrot.slane %v273, 2
        %v275 = vadd.f32 %v273, %v274
        %v276 = vrot.slane %v275, 1
        %v277 = vadd.f32 %v275, %v276
        %s278 = sld [smem:[#allocation2]]
        %v279 = vstv %s278
        %v280 = vadd.f32 %v270, %v279
        %v281 = vadd.f32 %v277, %v279
        %v282 = vxor.u32 %v280, 2147483648
        %v283 = vxor.u32 %v281, 2147483648
        %v284 = vmul.f32 %v282, 1.442695
        %v285 = vpow.pop %v284
        %v286 = vmul.f32 %v283, 1.442695
        %v287 = vpow.pop %v286
        %v288 = vadd.f32 %v285, 1.0
        %v289 = vadd.f32 %v287, 1.0
        %v290 = vrcp.pop %v288
        %v291 = vmul.f32 1.0, %v290
        %v292 = vrcp.pop %v289
        %v293 = vmul.f32 1.0, %v292
        %v294 = vld [vmem:[%s233] sm:$0xf]
        %296 = vset.pattern.permute.xlu0 0
        %297 = vperm.xlu0 %296, %v294
        %v298 = vpop.permute.xlu0 %297
        %v300 = vunpack.c.l.s4 839922192
        %v301 = vunpack.c.0.s8 %v300
        %v302 = vlaneseq
        %v303 = vshrl.u32 %v302, 7
        %v304 = vsub.s32 %v301, %v303
        %v305 = vrot.slane %v298, %v304
        %v307 = vmul.f32 %v245, %v305
        %v310 = vcombine.low %v291, %v293
        %v312 = vmul.f32 %v245, %v310
        %v313 = vmax.f32 %v307, %v312
        %314 = vst [vmem:[%s229] sm:$0xff] %v313
        %s315 = sand.u32 %s137, 1
        %s316 = scalar_lea.sflag [#allocation4], %s315
        %s317 = sand.u32 %s137, 1
        %s318 = smul.addr %s317, 8
        %s319 = scalar_lea.vmem [#allocation3], %s318
        // Predicated region
        $region37: #{tpu_custom_call.1} parent=35 // pred_check
          %p320 = pneg %p147
        $region38: #{tpu_custom_call.1} parent=35 // pred_check_branch
          %322 = sbr.rel (%p320) target = $region40
        $region39: #{tpu_custom_call.1} parent=35 // pred_region
          %s323 = smul.u32 2, %s24
          %s325 = ssub.s32 128, 128
          %326 = vsyncadd %s316, %s325
          %s327 = smul.addr %s23, 2
          %s328 = sadd.s32 %s323, %s327
          %s329 = smul.addr %s328, 64
          %s330 = scalar_lea.hbm %s4, %s329
          %s332 = sshll.u32 %s319, 4
          %s333 = int_to_ptr.vmem [resolvable:$true] %s332
          %335 = dma.vmem_to_hbm [thread:$0]  %s333, 128, %s330, %s316
        $region40: #{tpu_custom_call.1} parent=35 // pred_fallthru
          _
      $region36: #{tpu_custom_call.1} parent=5 // pred_fallthru
        _
      %p336 = scmp.le.s32.totalorder 2, %s14
      // Predicated region
      $region41: #{tpu_custom_call.1} parent=5 // pred_check
        %p337 = pneg %p336
      $region42: #{tpu_custom_call.1} parent=5 // pred_check_branch
        %339 = sbr.rel (%p337) target = $region44
      $region43: #{tpu_custom_call.1} parent=5 // pred_region
        %s340 = ssub.s32 %s14, 2
        // Predicated region
        $region45: #{tpu_custom_call.1} parent=43 // pred_check
          %p341 = pneg %p153
        $region46: #{tpu_custom_call.1} parent=43 // pred_check_branch
          %343 = sbr.rel (%p341) target = $region48
        $region47: #{tpu_custom_call.1} parent=43 // pred_region
          %s344 = sand.u32 %s138, 1
          %s345 = scalar_lea.sflag [#allocation4], %s344
          %s346 = sand.u32 %s138, 1
          %s347 = smul.addr %s346, 8
          %s348 = scalar_lea.vmem [#allocation3], %s347
          %349 = dma.done %s345, 128
        $region48: #{tpu_custom_call.1} parent=43 // pred_fallthru
          _
      $region44: #{tpu_custom_call.1} parent=5 // pred_fallthru
        _
    $region6: #{tpu_custom_call.1} parent=1 // loop_footer
      %s18 = sadd.s32 1, %s14
    $region7: #{tpu_custom_call.1} parent=1 // loop_footer_branch
      %13 = sbr.rel target = $region3
    $region8: #{tpu_custom_call.1} parent=1 // loop_exit
      _
    %350 = vsyncpa [#allocation4], 1
    %s351 = scalar_lea.sflag [#allocation4], 1
    %352 = vsyncpa %s351, 1

</llo_original>
